<compile_context>
chip_gen: v6e
topology: v6e:2x2x1
jax: 0.10.0
libtpu: 0.0.40
codegen_flags: <defaults>
</compile_context>

<pallas_src>
import jax
import jax.numpy as jnp
from jax.experimental import pallas as pl
from jax.experimental.pallas import tpu as pltpu

_IGNORE_INDEX = -100  # PyTorch CrossEntropyLoss default


def _ce_online_kernel(logits_ref, labels_ref, nll_ref, m_ref, l_ref, p_ref):
    """One (batch, row-tile, vocab-tile) block: online-logsumexp cross-entropy."""
    v_step = pl.program_id(2)
    tv = logits_ref.shape[-1]  # vocab chunk width (static)

    @pl.when(v_step == 0)
    def _init():
        m_ref[...] = jnp.full_like(m_ref, -jnp.inf)
        l_ref[...] = jnp.zeros_like(l_ref)
        p_ref[...] = jnp.zeros_like(p_ref)

    x = logits_ref[0]          # (TS, TV)  native dtype (f32 or bf16)
    lbl = labels_ref[0]        # (TS, 1)   int32 shifted labels

    # Label gather: compare/select/sum in the native dtype (at most one hit per
    # row, so low-precision accumulation is exact), accumulated across chunks.
    vocab_ids = jax.lax.broadcasted_iota(jnp.int32, x.shape, 1) + v_step * tv
    hit = jnp.where(vocab_ids == lbl, x, jnp.zeros_like(x))
    p_ref[...] += jnp.sum(hit, axis=-1, keepdims=True).astype(jnp.float32)

    # Online logsumexp: row max in native dtype, exp/sum in f32 on this chunk only.
    m_prev = m_ref[...]
    m_chunk = jnp.max(x, axis=-1, keepdims=True).astype(jnp.float32)
    m_new = jnp.maximum(m_prev, m_chunk)
    s_chunk = jnp.sum(jnp.exp(x.astype(jnp.float32) - m_new), axis=-1, keepdims=True)
    l_ref[...] = l_ref[...] * jnp.exp(m_prev - m_new) + s_chunk
    m_ref[...] = m_new

    @pl.when(v_step == pl.num_programs(2) - 1)
    def _finalize():
        valid = lbl >= 0
        lse = m_ref[...] + jnp.log(l_ref[...])
        nll_ref[0] = jnp.where(valid, lse - p_ref[...], 0.0)


def _sublane_pack(itemsize):
    # rows per packed sublane group: 8 (f32), 16 (bf16), 32 (int8/fp8)
    return max(8, 32 // max(itemsize, 1))


def _pick_row_tile(S, B, itemsize, max_rows=256):
    """Largest divisor of S that is pack-aligned (or == S), capped at max_rows,
    preferring an even total parallel extent B * (S // TS) for megacore."""
    pack = _sublane_pack(itemsize)
    cands = [ts for ts in range(1, S + 1)
             if S % ts == 0 and (ts % pack == 0 or ts == S)]
    fitting = [ts for ts in cands if ts <= max_rows] or [min(cands)]
    even = [ts for ts in fitting if (B * (S // ts)) % 2 == 0]
    return max(even) if even else max(fitting)


def _pick_vocab_tile(V, TS, itemsize, budget_bytes):
    """Largest divisor of V that is 128-aligned (or == V) whose (TS, TV) logits
    block fits the per-block byte budget."""
    cands = [tv for tv in range(1, V + 1)
             if V % tv == 0 and (tv % 128 == 0 or tv == V)]
    fitting = [tv for tv in cands if TS * tv * itemsize <= budget_bytes]
    return max(fitting) if fitting else min(cands)


def gpt_lm_loss(logits, labels, *, block_budget_bytes=None):
    """logits: (B, S, V) float (f32 or bf16); labels: (B, S) int.
    Returns scalar mean cross-entropy over non-ignored shifted tokens."""
    B, S, V = logits.shape
    assert labels.shape == (B, S)

    # Shift only the labels (cheap); last position gets the ignore index so the
    # kernel masks those rows -- no logits copy needed.
    shift_labels = jnp.concatenate(
        [labels[:, 1:].astype(jnp.int32),
         jnp.full((B, 1), _IGNORE_INDEX, jnp.int32)], axis=1)       # (B, S)
    labels3d = shift_labels.reshape(B, S, 1)

    itemsize = jnp.dtype(logits.dtype).itemsize

    # Hardware-aware budgets (fall back to the most conservative chip: v7x, 64 MiB).
    try:
        vmem_cap = int(pltpu.get_tpu_info().vmem_capacity_bytes)
    except Exception:  # pragma: no cover - defensive (e.g. interpret mode)
        vmem_cap = 64 << 20
    if block_budget_bytes is None:
        block_budget_bytes = (4 << 20) if vmem_cap <= (64 << 20) else (12 << 20)

    TS = _pick_row_tile(S, B, itemsize)
    TV = _pick_vocab_tile(V, TS, itemsize, block_budget_bytes)
    num_row_tiles = S // TS
    num_vocab_tiles = V // TV

    # Working-set estimate: double-buffered logits block + f32 chunk copy + exp
    # temp + compare mask + small (lane-padded) scratch / labels / output + slack.
    block_bytes = TS * TV * itemsize
    vmem_need = 2 * block_bytes + 3 * TS * TV * 4 + 8 * TS * 128 * 4 + (4 << 20)
    vmem_limit = int(min(max(vmem_need, 32 << 20), vmem_cap - (16 << 20)))

    per_token = pl.pallas_call(
        _ce_online_kernel,
        out_shape=jax.ShapeDtypeStruct((B, S, 1), jnp.float32),
        grid_spec=pltpu.PrefetchScalarGridSpec(
            num_scalar_prefetch=0,
            grid=(B, num_row_tiles, num_vocab_tiles),
            in_specs=[
                pl.BlockSpec((1, TS, TV), lambda b, s, v: (b, s, v)),  # logits chunk
                pl.BlockSpec((1, TS, 1), lambda b, s, v: (b, s, 0)),   # labels (resident across v)
            ],
            out_specs=pl.BlockSpec((1, TS, 1), lambda b, s, v: (b, s, 0)),
            scratch_shapes=[
                pltpu.VMEM((TS, 1), jnp.float32),   # running max  m
                pltpu.VMEM((TS, 1), jnp.float32),   # running sum  l
                pltpu.VMEM((TS, 1), jnp.float32),   # picked label logit
            ],
        ),
        compiler_params=pltpu.CompilerParams(
            dimension_semantics=("parallel", "parallel", "arbitrary"),
            vmem_limit_bytes=vmem_limit),
    )(logits, labels3d)                                              # (B, S, 1)

    # Final reduction + mean over valid (non-ignored) tokens, in plain JAX.
    n_valid = jnp.sum(shift_labels >= 0)
    total = jnp.sum(per_token)
    return total / jnp.maximum(n_valid, 1).astype(jnp.float32)


def _reference_loss(logits, labels):
    shift_logits = logits[:, :-1, :].reshape(-1, logits.shape[-1]).astype(jnp.float32)
    shift_labels = labels[:, 1:].reshape(-1)
    logp = jax.nn.log_softmax(shift_logits, axis=-1)
    nll = -jnp.take_along_axis(logp, shift_labels[:, None], axis=-1)[:, 0]
    return jnp.mean(nll)


if __name__ == "__main__":
    key = jax.random.PRNGKey(0)
    k1, k2 = jax.random.split(key)

    B, S, V = 2, 8, 128  # small GPT-like shapes: batch=2, seq=8, vocab=128
    logits = jax.random.normal(k1, (B, S, V), dtype=jnp.float32)
    labels = jax.random.randint(k2, (B, S), 0, V, dtype=jnp.int32)

    loss = jax.block_until_ready(gpt_lm_loss(logits, labels))
    ref = jax.block_until_ready(_reference_loss(logits, labels))
    assert jnp.allclose(loss, ref, rtol=1e-5, atol=1e-5), (loss, ref)

    print("KERNEL_OK")
</pallas_src>

<mosaic_0001>
module attributes {stable_mosaic.version = 11 : i64} {
  func.func @_ce_online_kernel(%arg0: i32, %arg1: i32, %arg2: i32, %arg3: memref<1x8x128xf32, #tpu.memory_space<vmem>>, %arg4: memref<1x8x1xi32, #tpu.memory_space<vmem>>, %arg5: memref<1x8x1xf32, #tpu.memory_space<vmem>>, %arg6: memref<8x1xf32, #tpu.memory_space<vmem>>, %arg7: memref<8x1xf32, #tpu.memory_space<vmem>>, %arg8: memref<8x1xf32, #tpu.memory_space<vmem>>) attributes {dimension_semantics = [#tpu.dimension_semantics<parallel>, #tpu.dimension_semantics<parallel>, #tpu.dimension_semantics<arbitrary>], iteration_bounds = array<i64: 2, 1, 1>, scalar_prefetch = 0 : i64, scratch_operands = 3 : i64, tpu.core_type = #tpu.core_type<tc>, window_params = [{transform_indices = @transform_0, window_bounds = array<i64: 1, 8, 128>}, {transform_indices = @transform_1, window_bounds = array<i64: 1, 8, 1>}, {transform_indices = @transform_2, window_bounds = array<i64: 1, 8, 1>}]} {
    %c0_i32 = arith.constant 0 : i32
    %0 = arith.cmpi eq, %arg2, %c0_i32 : i32
    %1 = arith.extui %0 : i1 to i32
    %c0_i32_0 = arith.constant 0 : i32
    %2 = arith.cmpi ne, %1, %c0_i32_0 : i32
    scf.if %2 {
      %cst_23 = arith.constant 0xFF800000 : f32
      %39 = vector.broadcast %cst_23 : f32 to vector<8x1xf32>
      %c0_24 = arith.constant 0 : index
      %c0_25 = arith.constant 0 : index
      %40 = vector.load %arg6[%c0_24, %c0_25] : memref<8x1xf32, #tpu.memory_space<vmem>>, vector<8x1xf32>
      tpu.vector_store %arg6[%c0_24, %c0_25], %39 {strides = array<i32>} : memref<8x1xf32, #tpu.memory_space<vmem>>, vector<8x1xf32>,
      %cst_26 = arith.constant 0.000000e+00 : f32
      %41 = vector.broadcast %cst_26 : f32 to vector<8x1xf32>
      %c0_27 = arith.constant 0 : index
      %c0_28 = arith.constant 0 : index
      %42 = vector.load %arg7[%c0_27, %c0_28] : memref<8x1xf32, #tpu.memory_space<vmem>>, vector<8x1xf32>
      tpu.vector_store %arg7[%c0_27, %c0_28], %41 {strides = array<i32>} : memref<8x1xf32, #tpu.memory_space<vmem>>, vector<8x1xf32>,
      %cst_29 = arith.constant 0.000000e+00 : f32
      %43 = vector.broadcast %cst_29 : f32 to vector<8x1xf32>
      %c0_30 = arith.constant 0 : index
      %c0_31 = arith.constant 0 : index
      %44 = vector.load %arg8[%c0_30, %c0_31] : memref<8x1xf32, #tpu.memory_space<vmem>>, vector<8x1xf32>
      tpu.vector_store %arg8[%c0_30, %c0_31], %43 {strides = array<i32>} : memref<8x1xf32, #tpu.memory_space<vmem>>, vector<8x1xf32>,
    } else {
    }
    %c0 = arith.constant 0 : index
    %c0_1 = arith.constant 0 : index
    %c0_2 = arith.constant 0 : index
    %3 = vector.load %arg3[%c0, %c0_1, %c0_2] : memref<1x8x128xf32, #tpu.memory_space<vmem>>, vector<1x8x128xf32>
    %4 = vector.shape_cast %3 : vector<1x8x128xf32> to vector<8x128xf32>
    %c0_3 = arith.constant 0 : index
    %c0_4 = arith.constant 0 : index
    %c0_5 = arith.constant 0 : index
    %5 = vector.load %arg4[%c0_3, %c0_4, %c0_5] : memref<1x8x1xi32, #tpu.memory_space<vmem>>, vector<1x8x1xi32>
    %6 = vector.shape_cast %5 : vector<1x8x1xi32> to vector<8x1xi32>
    %7 = tpu.iota {dimensions = array<i32: 1>} : vector<8x128xi32>
    %c128_i32 = arith.constant 128 : i32
    %8 = arith.muli %arg2, %c128_i32 : i32
    %9 = vector.broadcast %8 : i32 to vector<8x128xi32>
    %10 = arith.addi %7, %9 : vector<8x128xi32>
    %11 = vector.broadcast %6 : vector<8x1xi32> to vector<8x128xi32>
    %12 = arith.cmpi eq, %10, %11 : vector<8x128xi32>
    %cst = arith.constant 0.000000e+00 : f32
    %13 = vector.broadcast %cst : f32 to vector<8x128xf32>
    %14 = arith.select %12, %4, %13 : vector<8x128xi1>, vector<8x128xf32>
    %c0_6 = arith.constant 0 : index
    %c0_7 = arith.constant 0 : index
    %15 = vector.load %arg8[%c0_6, %c0_7] : memref<8x1xf32, #tpu.memory_space<vmem>>, vector<8x1xf32>
    %cst_8 = arith.constant dense<0.000000e+00> : vector<8xf32>
    %16 = vector.multi_reduction <add>, %14, %cst_8 [1] : vector<8x128xf32> to vector<8xf32>
    %17 = vector.shape_cast %16 : vector<8xf32> to vector<8x1xf32>
    %18 = arith.addf %15, %17 : vector<8x1xf32>
    %c0_9 = arith.constant 0 : index
    %c0_10 = arith.constant 0 : index
    %19 = vector.load %arg8[%c0_9, %c0_10] : memref<8x1xf32, #tpu.memory_space<vmem>>, vector<8x1xf32>
    tpu.vector_store %arg8[%c0_9, %c0_10], %18 {strides = array<i32>} : memref<8x1xf32, #tpu.memory_space<vmem>>, vector<8x1xf32>,
    %c0_11 = arith.constant 0 : index
    %c0_12 = arith.constant 0 : index
    %20 = vector.load %arg6[%c0_11, %c0_12] : memref<8x1xf32, #tpu.memory_space<vmem>>, vector<8x1xf32>
    %cst_13 = arith.constant dense<0xFF800000> : vector<8xf32>
    %21 = vector.multi_reduction <maximumf>, %4, %cst_13 [1] : vector<8x128xf32> to vector<8xf32>
    %22 = vector.shape_cast %21 : vector<8xf32> to vector<8x1xf32>
    %23 = arith.maximumf %20, %22 : vector<8x1xf32>
    %24 = vector.broadcast %23 : vector<8x1xf32> to vector<8x128xf32>
    %25 = arith.subf %4, %24 : vector<8x128xf32>
    %26 = math.exp %25 : vector<8x128xf32>
    %cst_14 = arith.constant dense<0.000000e+00> : vector<8xf32>
    %27 = vector.multi_reduction <add>, %26, %cst_14 [1] : vector<8x128xf32> to vector<8xf32>
    %28 = vector.shape_cast %27 : vector<8xf32> to vector<8x1xf32>
    %c0_15 = arith.constant 0 : index
    %c0_16 = arith.constant 0 : index
    %29 = vector.load %arg7[%c0_15, %c0_16] : memref<8x1xf32, #tpu.memory_space<vmem>>, vector<8x1xf32>
    %30 = arith.subf %20, %23 : vector<8x1xf32>
    %31 = math.exp %30 : vector<8x1xf32>
    %32 = arith.mulf %29, %31 : vector<8x1xf32>
    %33 = arith.addf %32, %28 : vector<8x1xf32>
    %c0_17 = arith.constant 0 : index
    %c0_18 = arith.constant 0 : index
    %34 = vector.load %arg7[%c0_17, %c0_18] : memref<8x1xf32, #tpu.memory_space<vmem>>, vector<8x1xf32>
    tpu.vector_store %arg7[%c0_17, %c0_18], %33 {strides = array<i32>} : memref<8x1xf32, #tpu.memory_space<vmem>>, vector<8x1xf32>,
    %c0_19 = arith.constant 0 : index
    %c0_20 = arith.constant 0 : index
    %35 = vector.load %arg6[%c0_19, %c0_20] : memref<8x1xf32, #tpu.memory_space<vmem>>, vector<8x1xf32>
    tpu.vector_store %arg6[%c0_19, %c0_20], %23 {strides = array<i32>} : memref<8x1xf32, #tpu.memory_space<vmem>>, vector<8x1xf32>,
    %c0_i32_21 = arith.constant 0 : i32
    %36 = arith.cmpi eq, %arg2, %c0_i32_21 : i32
    %37 = arith.extui %36 : i1 to i32
    %c0_i32_22 = arith.constant 0 : i32
    %38 = arith.cmpi ne, %37, %c0_i32_22 : i32
    scf.if %38 {
      %c0_i32_23 = arith.constant 0 : i32
      %39 = vector.broadcast %c0_i32_23 : i32 to vector<8x1xi32>
      %40 = arith.cmpi sge, %6, %39 : vector<8x1xi32>
      %c0_24 = arith.constant 0 : index
      %c0_25 = arith.constant 0 : index
      %41 = vector.load %arg6[%c0_24, %c0_25] : memref<8x1xf32, #tpu.memory_space<vmem>>, vector<8x1xf32>
      %c0_26 = arith.constant 0 : index
      %c0_27 = arith.constant 0 : index
      %42 = vector.load %arg7[%c0_26, %c0_27] : memref<8x1xf32, #tpu.memory_space<vmem>>, vector<8x1xf32>
      %43 = math.log %42 : vector<8x1xf32>
      %44 = arith.addf %41, %43 : vector<8x1xf32>
      %c0_28 = arith.constant 0 : index
      %c0_29 = arith.constant 0 : index
      %45 = vector.load %arg8[%c0_28, %c0_29] : memref<8x1xf32, #tpu.memory_space<vmem>>, vector<8x1xf32>
      %46 = arith.subf %44, %45 : vector<8x1xf32>
      %cst_30 = arith.constant 0.000000e+00 : f32
      %47 = vector.broadcast %cst_30 : f32 to vector<8x1xf32>
      %48 = arith.select %40, %46, %47 : vector<8x1xi1>, vector<8x1xf32>
      %c0_31 = arith.constant 0 : index
      %c0_32 = arith.constant 0 : index
      %c0_33 = arith.constant 0 : index
      %49 = vector.load %arg5[%c0_31, %c0_32, %c0_33] : memref<1x8x1xf32, #tpu.memory_space<vmem>>, vector<1x8x1xf32>
      %50 = vector.shape_cast %49 : vector<1x8x1xf32> to vector<8x1xf32>
      %51 = vector.shape_cast %48 : vector<8x1xf32> to vector<1x8x1xf32>
      tpu.vector_store %arg5[%c0_31, %c0_32, %c0_33], %51 {strides = array<i32>} : memref<1x8x1xf32, #tpu.memory_space<vmem>>, vector<1x8x1xf32>,
    } else {
    }
    return
  }
  func.func @transform_0(%arg0: i32, %arg1: i32, %arg2: i32) -> (i32, i32, i32) {
    %c0_i32 = arith.constant 0 : i32
    return %arg0, %arg1, %arg2 : i32, i32, i32
  }
  func.func @transform_1(%arg0: i32, %arg1: i32, %arg2: i32) -> (i32, i32, i32) {
    %c0_i32 = arith.constant 0 : i32
    %c0_i32_0 = arith.constant 0 : i32
    return %arg0, %arg1, %c0_i32 : i32, i32, i32
  }
  func.func @transform_2(%arg0: i32, %arg1: i32, %arg2: i32) -> (i32, i32, i32) {
    %c0_i32 = arith.constant 0 : i32
    %c0_i32_0 = arith.constant 0 : i32
    return %arg0, %arg1, %c0_i32 : i32, i32, i32
  }
}

</mosaic_0001>

<llo_original>
// kernel: tpu_custom_call.1
$region0: #{tpu_custom_call.1}
  #allocation0 [shape = 'u32[]', space=smem, size = 0x4, offset = 0x4, fixed_abs, tag = 'smem constant byte address 0x4 - core index']
  #allocation1 [shape = 'u32[144,128]{1,0:T(1,128)}', space=vmem, size = 0x12000, scoped, tag = 'internal scratch']
  #allocation2 [shape = 'f32[8,1]{1,0:T(8,128)}', space=vmem, size = 0x1000, scoped, tag = 'scratch operand']
  #allocation3 [shape = 'f32[8,1]{1,0:T(8,128)}', space=vmem, size = 0x1000, scoped, tag = 'scratch operand']
  #allocation4 [shape = 'f32[8,1]{1,0:T(8,128)}', space=vmem, size = 0x1000, scoped, tag = 'scratch operand']
  %s0 = inlined_call_operand.vmem [shape: f32[2,8,128], index: 0, kind: input, shape index: {}]
  %s1 = inlined_call_operand.vmem [shape: s32[2,8,1], index: 1, kind: input, shape index: {}]
  %s2 = inlined_call_operand.vmem [shape: f32[2,8,1], index: 2, kind: output, shape index: {}]
  %s3 = sld [smem:[#allocation0]]
  $region49: #{tpu_custom_call.1} parent=0
    _
  %s5 = ssub.s32 1, %s3
  %s6 = scalar_select 0, %s5, %s3
  loop: start=0, step=1, limit=4
  $region2: #{tpu_custom_call.1} parent=0 // loop_pre_header
    _
  $region3: #{tpu_custom_call.1} parent=0 // loop_header
    %s8 = sphi 0, %s12
    %p9 = scmp.ge.s32.totalorder %s8, 4
    %s15 = sphi 0, %s34
    %s16 = sphi 0, %s30
    %s17 = sphi 0, %s26
    %s18 = sphi 0, %s15
    %s19 = sphi 0, %s16
    %s20 = sphi 0, %s17
    %s21 = sphi 0, %s18
    %s22 = sphi 0, %s19
    %s23 = sphi 0, %s20
    %s41 = sphi 0, %s43
    %s44 = sphi 0, %s41
    %s45 = sphi 0, %s44
    %s61 = sphi 0, %s45
    %s69 = sphi 0, %s71
    %s72 = sphi 0, %s69
    %s73 = sphi 0, %s72
    %s89 = sphi 0, %s73
    %s97 = sphi 0, %s99
    %s100 = sphi 0, %s97
    %s101 = sphi 0, %s100
    %s117 = sphi 0, %s101
  $region4: #{tpu_custom_call.1} parent=0 // loop_header_branch
    %11 = sbr.rel (%p9) target = $region8
  $region5: #{tpu_custom_call.1} parent=0 // loop_body
    %s13 = ssub.s32 %s8, 1
    %s14 = ssub.s32 %s8, 2
    %s24 = sadd.s32 1, %s17
    %p25 = scmp.ge.s32.totalorder %s24, 1
    %s26 = scalar_select %p25, 0, %s24
    %s27 = sadd.s32 1, %s16
    %s28 = scalar_select %p25, %s27, %s16
    %p29 = scmp.ge.s32.totalorder %s28, 1
    %s30 = scalar_select %p29, 0, %s28
    %s31 = sadd.s32 1, %s15
    %s32 = scalar_select %p29, %s31, %s15
    %p33 = scmp.ge.s32.totalorder %s32, 2
    %s34 = scalar_select %p33, 0, %s32
    %s35 = ssub.s32 %s15, %s34
    %s36 = ssub.s32 %s16, %s30
    %s37 = sor.u32 %s35, %s36
    %s38 = ssub.s32 %s17, %s26
    %s39 = sor.u32 %s37, %s38
    %p40 = scmp.eq.s32.totalorder %s39, 0
    %s42 = sadd.s32 %s41, 1
    %s43 = scalar_select %p40, %s41, %s42
    %p46 = pneg %p40
    %p47 = scmp.eq.s32.totalorder %s8, 1
    %p48 = por %p46, %p47
    %p49 = scmp.ne.s32.totalorder %s41, %s44
    %p50 = scmp.eq.s32.totalorder %s8, 0
    %p51 = por %p49, %p50
    %p52 = scmp.ne.s32.totalorder %s41, %s44
    %p53 = scmp.eq.s32.totalorder %s13, 1
    %p54 = por %p52, %p53
    %p55 = scmp.ne.s32.totalorder %s44, %s45
    %p56 = scmp.eq.s32.totalorder %s13, 0
    %p57 = por %p55, %p56
    %p58 = scmp.ne.s32.totalorder %s44, %s45
    %p59 = scmp.eq.s32.totalorder %s14, 1
    %p60 = por %p58, %p59
    %p62 = scmp.ne.s32.totalorder %s45, %s61
    %p63 = scmp.eq.s32.totalorder %s14, 0
    %p64 = por %p62, %p63
    %s65 = ssub.s32 %s15, %s34
    %s66 = ssub.s32 %s16, %s30
    %s67 = sor.u32 %s65, %s66
    %p68 = scmp.eq.s32.totalorder %s67, 0
    %s70 = sadd.s32 %s69, 1
    %s71 = scalar_select %p68, %s69, %s70
    %p74 = pneg %p68
    %p75 = scmp.eq.s32.totalorder %s8, 1
    %p76 = por %p74, %p75
    %p77 = scmp.ne.s32.totalorder %s69, %s72
    %p78 = scmp.eq.s32.totalorder %s8, 0
    %p79 = por %p77, %p78
    %p80 = scmp.ne.s32.totalorder %s69, %s72
    %p81 = scmp.eq.s32.totalorder %s13, 1
    %p82 = por %p80, %p81
    %p83 = scmp.ne.s32.totalorder %s72, %s73
    %p84 = scmp.eq.s32.totalorder %s13, 0
    %p85 = por %p83, %p84
    %p86 = scmp.ne.s32.totalorder %s72, %s73
    %p87 = scmp.eq.s32.totalorder %s14, 1
    %p88 = por %p86, %p87
    %p90 = scmp.ne.s32.totalorder %s73, %s89
    %p91 = scmp.eq.s32.totalorder %s14, 0
    %p92 = por %p90, %p91
    %s93 = ssub.s32 %s15, %s34
    %s94 = ssub.s32 %s16, %s30
    %s95 = sor.u32 %s93, %s94
    %p96 = scmp.eq.s32.totalorder %s95, 0
    %s98 = sadd.s32 %s97, 1
    %s99 = scalar_select %p96, %s97, %s98
    %p102 = pneg %p96
    %p103 = scmp.eq.s32.totalorder %s8, 1
    %p104 = por %p102, %p103
    %p105 = scmp.ne.s32.totalorder %s97, %s100
    %p106 = scmp.eq.s32.totalorder %s8, 0
    %p107 = por %p105, %p106
    %p108 = scmp.ne.s32.totalorder %s97, %s100
    %p109 = scmp.eq.s32.totalorder %s13, 1
    %p110 = por %p108, %p109
    %p111 = scmp.ne.s32.totalorder %s100, %s101
    %p112 = scmp.eq.s32.totalorder %s13, 0
    %p113 = por %p111, %p112
    %p114 = scmp.ne.s32.totalorder %s100, %s101
    %p115 = scmp.eq.s32.totalorder %s14, 1
    %p116 = por %p114, %p115
    %p118 = scmp.ne.s32.totalorder %s101, %s117
    %p119 = scmp.eq.s32.totalorder %s14, 0
    %p120 = por %p118, %p119
    %p121 = scmp.le.s32.totalorder 1, %s8
    %p122 = scmp.lt.s32.totalorder %s8, 3
    %p123 = pnand %p121, %p122
    %p124 = pneg %p123
    // Predicated region
    $region9: #{tpu_custom_call.1} parent=5 // pred_check
      _
    $region10: #{tpu_custom_call.1} parent=5 // pred_check_branch
      %126 = sbr.rel (%p123) target = $region12
    $region11: #{tpu_custom_call.1} parent=5 // pred_region
      %s127 = ssub.s32 %s8, 1
    $region12: #{tpu_custom_call.1} parent=5 // pred_fallthru
      _
    %p128 = scmp.lt.s32.totalorder %s8, 2
    // Predicated region
    $region13: #{tpu_custom_call.1} parent=5 // pred_check
      %p129 = pneg %p128
    $region14: #{tpu_custom_call.1} parent=5 // pred_check_branch
      %131 = sbr.rel (%p129) target = $region16
    $region15: #{tpu_custom_call.1} parent=5 // pred_region
      // Predicated region
      $region17: #{tpu_custom_call.1} parent=15 // pred_check
        %p132 = pneg %p51
      $region18: #{tpu_custom_call.1} parent=15 // pred_check_branch
        %134 = sbr.rel (%p132) target = $region20
      $region19: #{tpu_custom_call.1} parent=15 // pred_region
        %p135 = scmp.lt.s32.totalorder %s15, 1
        %s136 = scalar_select %p135, %s15, 1
        %p137 = scmp.lt.s32.totalorder %s16, 0
        %s138 = scalar_select %p137, %s16, 0
        %p139 = scmp.lt.s32.totalorder %s17, 0
        %s140 = scalar_select %p139, %s17, 0
        %s141 = sadd.s32 %s140, %s138
        %s142 = sadd.s32 %s141, %s136
        %s143 = smul.addr %s142, 8
        %s144 = scalar_lea.vmem %s0, %s143
      $region20: #{tpu_custom_call.1} parent=15 // pred_fallthru
        _
      // Predicated region
      $region21: #{tpu_custom_call.1} parent=15 // pred_check
        %p145 = pneg %p79
      $region22: #{tpu_custom_call.1} parent=15 // pred_check_branch
        %147 = sbr.rel (%p145) target = $region24
      $region23: #{tpu_custom_call.1} parent=15 // pred_region
        %p148 = scmp.lt.s32.totalorder %s15, 1
        %s149 = scalar_select %p148, %s15, 1
        %p150 = scmp.lt.s32.totalorder %s16, 0
        %s151 = scalar_select %p150, %s16, 0
        %s152 = sadd.s32 %s151, %s149
        %s153 = smul.addr %s152, 8
        %s154 = scalar_lea.vmem %s1, %s153
      $region24: #{tpu_custom_call.1} parent=15 // pred_fallthru
        _
    $region16: #{tpu_custom_call.1} parent=5 // pred_fallthru
      _
    %p155 = scmp.le.s32.totalorder 1, %s8
    %p156 = scmp.lt.s32.totalorder %s8, 3
    %p157 = pnand %p155, %p156
    %p158 = pneg %p157
    // Predicated region
    $region25: #{tpu_custom_call.1} parent=5 // pred_check
      _
    $region26: #{tpu_custom_call.1} parent=5 // pred_check_branch
      %160 = sbr.rel (%p157) target = $region28
    $region27: #{tpu_custom_call.1} parent=5 // pred_region
      %s161 = ssub.s32 %s8, 1
      %p162 = scmp.lt.s32.totalorder %s18, 1
      %s163 = scalar_select %p162, %s18, 1
      %p164 = scmp.lt.s32.totalorder %s19, 0
      %s165 = scalar_select %p164, %s19, 0
      %p166 = scmp.lt.s32.totalorder %s20, 0
      %s167 = scalar_select %p166, %s20, 0
      %s168 = sadd.s32 %s167, %s165
      %s169 = sadd.s32 %s168, %s163
      %s170 = smul.addr %s169, 8
      %s171 = scalar_lea.vmem %s0, %s170
      %p172 = pneg %p57
      %p173 = pneg %p54
      %p174 = scmp.lt.s32.totalorder %s18, 1
      %s175 = scalar_select %p174, %s18, 1
      %p176 = scmp.lt.s32.totalorder %s19, 0
      %s177 = scalar_select %p176, %s19, 0
      %s178 = sadd.s32 %s177, %s175
      %s179 = smul.addr %s178, 8
      %s180 = scalar_lea.vmem %s1, %s179
      %p181 = pneg %p85
      %p182 = pneg %p82
      %p183 = pneg %p113
      %p184 = pneg %p110
      %p185 = scmp.lt.s32.totalorder %s18, 1
      %s186 = scalar_select %p185, %s18, 1
      %p187 = scmp.lt.s32.totalorder %s19, 0
      %s188 = scalar_select %p187, %s19, 0
      %s189 = sadd.s32 %s188, %s186
      %s190 = smul.addr %s189, 8
      %s191 = scalar_lea.vmem %s2, %s190
      %p192 = scmp.lt.s32.totalorder %s18, 1
      %s193 = scalar_select %p192, %s18, 1
      %p194 = scmp.lt.s32.totalorder %s19, 0
      %s195 = scalar_select %p194, %s19, 0
      %p196 = scmp.lt.s32.totalorder %s20, 0
      %s197 = scalar_select %p196, %s20, 0
      %s198 = sadd.s32 %s197, %s195
      %s199 = sadd.s32 %s198, %s193
      %s200 = smul.addr %s199, 8
      %s201 = scalar_lea.vmem %s0, %s200
      %p202 = scmp.lt.s32.totalorder %s18, 1
      %s203 = scalar_select %p202, %s18, 1
      %p204 = scmp.lt.s32.totalorder %s19, 0
      %s205 = scalar_select %p204, %s19, 0
      %s206 = sadd.s32 %s205, %s203
      %s207 = smul.addr %s206, 8
      %s208 = scalar_lea.vmem %s1, %s207
      %p209 = scmp.lt.s32.totalorder %s18, 1
      %s210 = scalar_select %p209, %s18, 1
      %p211 = scmp.lt.s32.totalorder %s19, 0
      %s212 = scalar_select %p211, %s19, 0
      %s213 = sadd.s32 %s212, %s210
      %s214 = smul.addr %s213, 8
      %s215 = scalar_lea.vmem %s2, %s214
      %p216 = scmp.eq.s32.totalorder %s20, 0
      // Predicated region
      $region29: #{tpu_custom_call.1} parent=27 // pred_check
        %p217 = pneg %p216
      $region30: #{tpu_custom_call.1} parent=27 // pred_check_branch
        %219 = sbr.rel (%p217) target = $region32
      $region31: #{tpu_custom_call.1} parent=27 // pred_region
        %vm220 = vcmask 7168
        %221 = vst.msk [vmem:[#allocation2] sm:$0xff] %vm220, -inf
        %222 = vst.msk [vmem:[#allocation3] sm:$0xff] %vm220, 0.0
        %223 = vst.msk [vmem:[#allocation4] sm:$0xff] %vm220, 0.0
      $region32: #{tpu_custom_call.1} parent=27 // pred_fallthru
        _
      %v224 = vld [vmem:[%s201] sm:$0xff]
      %v225 = vld [vmem:[%s208] sm:$0xff]
      %v226 = vlaneseq
      %v227 = vand.u32 %v226, 127
      %s228 = smul.u32 %s20, 128
      %v229 = vstv %s228
      %v230 = vadd.s32 %v227, %v229
      %231 = vset.pattern.permute.xlu0 0
      %232 = vperm.xlu0 %231, %v225
      %v233 = vpop.permute.xlu0 %232
      %vm234 = vcmp.eq.s32.totalorder %v230, %v233
      %v235 = vsel %vm234, %v224, 0.0
      %v236 = vld [vmem:[#allocation4] sm:$0xff]
      %237 = vadd.xlane.f32.xlu0 %v235
      %v238 = vpop.xlane.xlu0 %237
      %v239 = vadd.f32 %v236, %v238
      %vm240 = vcmask 7168
      %241 = vst.msk [vmem:[#allocation4] sm:$0xff] %vm240, %v239
      %v242 = vld [vmem:[#allocation2] sm:$0xff]
      %243 = vmax.xlane.f32.xlu0 %v224
      %v244 = vpop.xlane.xlu0 %243
      %v245 = vmax.f32 %v242, %v244
      %247 = vset.pattern.permute.xlu0 0
      %248 = vperm.xlu0 %247, %v245
      %v249 = vpop.permute.xlu0 %248
      %v251 = vsub.f32 %v224, %v249
      %v252 = vmul.f32 %v251, 1.442695
      %v253 = vpow.pop %v252
      %254 = vadd.xlane.f32.xlu0 %v253
      %v255 = vpop.xlane.xlu0 %254
      %v256 = vld [vmem:[#allocation3] sm:$0xff]
      %v257 = vsub.f32 %v242, %v245
      %v258 = vmul.f32 %v257, 1.442695
      %v259 = vpow.pop %v258
      %v260 = vmul.f32 %v256, %v259
      %v261 = vadd.f32 %v260, %v255
      %262 = vst.msk [vmem:[#allocation3] sm:$0xff] %vm240, %v261
      %263 = vst.msk [vmem:[#allocation2] sm:$0xff] %vm240, %v245
      // Predicated region
      $region33: #{tpu_custom_call.1} parent=27 // pred_check
        %p264 = pneg %p216
      $region34: #{tpu_custom_call.1} parent=27 // pred_check_branch
        %266 = sbr.rel (%p264) target = $region36
      $region35: #{tpu_custom_call.1} parent=27 // pred_region
        %vm267 = vcmp.ge.s32.totalorder %v225, 0
        %v268 = vld [vmem:[#allocation2] sm:$0xff]
        %v269 = vld [vmem:[#allocation3] sm:$0xff]
        %v270 = vlog2.pop %v269
        %v271 = vmul.f32 %v270, 0.6931472
        %v272 = vadd.f32 %v268, %v271
        %v273 = vld [vmem:[#allocation4] sm:$0xff]
        %v274 = vsub.f32 %v272, %v273
        %v275 = vsel %vm267, %v274, 0.0
        %276 = vst.msk [vmem:[%s215] sm:$0xff] %vm240, %v275
      $region36: #{tpu_custom_call.1} parent=27 // pred_fallthru
        _
      %p277 = scmp.lt.s32.totalorder %s18, 1
      %s278 = scalar_select %p277, %s18, 1
      %p279 = scmp.lt.s32.totalorder %s19, 0
      %s280 = scalar_select %p279, %s19, 0
      %s281 = sadd.s32 %s280, %s278
      %s282 = smul.addr %s281, 8
      %s283 = scalar_lea.vmem %s2, %s282
      // Predicated region
      $region37: #{tpu_custom_call.1} parent=27 // pred_check
        %p284 = pneg %p110
      $region38: #{tpu_custom_call.1} parent=27 // pred_check_branch
        %286 = sbr.rel (%p284) target = $region40
      $region39: #{tpu_custom_call.1} parent=27 // pred_region
        _
      $region40: #{tpu_custom_call.1} parent=27 // pred_fallthru
        _
    $region28: #{tpu_custom_call.1} parent=5 // pred_fallthru
      _
    %p287 = scmp.le.s32.totalorder 2, %s8
    // Predicated region
    $region41: #{tpu_custom_call.1} parent=5 // pred_check
      %p288 = pneg %p287
    $region42: #{tpu_custom_call.1} parent=5 // pred_check_branch
      %290 = sbr.rel (%p288) target = $region44
    $region43: #{tpu_custom_call.1} parent=5 // pred_region
      %s291 = ssub.s32 %s8, 2
      // Predicated region
      $region45: #{tpu_custom_call.1} parent=43 // pred_check
        %p292 = pneg %p116
      $region46: #{tpu_custom_call.1} parent=43 // pred_check_branch
        %294 = sbr.rel (%p292) target = $region48
      $region47: #{tpu_custom_call.1} parent=43 // pred_region
        %p295 = scmp.lt.s32.totalorder %s21, 1
        %s296 = scalar_select %p295, %s21, 1
        %p297 = scmp.lt.s32.totalorder %s22, 0
        %s298 = scalar_select %p297, %s22, 0
        %s299 = sadd.s32 %s298, %s296
        %s300 = smul.addr %s299, 8
        %s301 = scalar_lea.vmem %s2, %s300
      $region48: #{tpu_custom_call.1} parent=43 // pred_fallthru
        _
    $region44: #{tpu_custom_call.1} parent=5 // pred_fallthru
      _
  $region6: #{tpu_custom_call.1} parent=0 // loop_footer
    %s12 = sadd.s32 1, %s8
  $region7: #{tpu_custom_call.1} parent=0 // loop_footer_branch
    %7 = sbr.rel target = $region3
  $region8: #{tpu_custom_call.1} parent=0 // loop_exit
    _

</llo_original>
